<compile_context>
chip_gen: v5e
topology: v5e:2x2
jax: 0.10.0
libtpu: 0.0.40
codegen_flags: <defaults>
</compile_context>

<pallas_src>
import jax
import jax.numpy as jnp
from jax.experimental import pallas as pl
from jax.experimental.pallas import tpu as pltpu

INPUT_SIZE = 4          # raw input feature channels
CONV1_OUT = 16          # first Conv1d out_channels (hard-coded 16 in the module)
HIDDEN1 = 16            # hidden_size: conv2 out channels == LSTM input size
HIDDEN2 = 8             # hidden_size2: LSTM hidden size
FC_MID = HIDDEN2 // 2   # fc output size
NUM_CLASSES = 12
KSIZE = 3               # Conv1d kernel_size=3, stride=1, padding=1


def _conv_relu_pool(x, w_ref, b_ref):
    """Conv1d(k=3, pad=1) + ReLU + MaxPool1d(2,2) in channels-last layout.

    x: (NB, L, Cin) f32.  w_ref: (3, Cin, Cout) Ref.  b_ref: (1, Cout) Ref.
    Returns (NB, L//2, Cout) f32.
    """
    nb, L, cin = x.shape
    cout = w_ref.shape[-1]
    zero = jnp.zeros((nb, 1, cin), jnp.float32)
    xp = jnp.concatenate([zero, x, zero], axis=1)            # padding=1 in time
    acc = jnp.zeros((nb * L, cout), jnp.float32)
    for k in range(KSIZE):                                   # static 3-tap unroll
        xk = xp[:, k:k + L, :].reshape(nb * L, cin)
        acc = acc + jnp.dot(xk, w_ref[k], preferred_element_type=jnp.float32)
    y = jnp.maximum(acc + b_ref[...], 0.0).reshape(nb, L, cout)     # + bias, ReLU
    # MaxPool1d(kernel_size=2, stride=2) along time; static unroll (L is small)
    pooled = [jnp.maximum(y[:, 2 * t:2 * t + 1, :], y[:, 2 * t + 1:2 * t + 2, :])
              for t in range(L // 2)]
    return jnp.concatenate(pooled, axis=1)                   # (NB, L//2, Cout)


def cnn_lstm_kernel(
    x_ref,                        # (NB, L, INPUT_SIZE)
    w1_ref, b1_ref,               # (3, INPUT_SIZE, CONV1_OUT), (1, CONV1_OUT)
    w2_ref, b2_ref,               # (3, CONV1_OUT, HIDDEN1),    (1, HIDDEN1)
    wih_ref, whh_ref, blstm_ref,  # (HIDDEN1, 4*H2), (H2, 4*H2), (1, 4*H2)
    wfc_ref, bfc_ref,             # (H2, FC_MID), (1, FC_MID)
    wfc1_ref, bfc1_ref,           # (FC_MID, NUM_CLASSES), (1, NUM_CLASSES)
    out_ref,                      # (NB, NUM_CLASSES)
):
    x = x_ref[...].astype(jnp.float32)                       # (NB, L, Cin)
    nb = x.shape[0]

    # ---- CNN stack --------------------------------------------------------
    y = _conv_relu_pool(x, w1_ref, b1_ref)                   # (NB, L/2, 16)
    y = _conv_relu_pool(y, w2_ref, b2_ref)                   # (NB, L/4, HIDDEN1)

    # ---- LSTM (batch_first, 1 layer, h0=c0=0); only final h_T is needed ----
    T = y.shape[1]
    h2 = HIDDEN2
    # Hoisted input projection for ALL timesteps in one MXU matmul.
    xg = jnp.dot(y.reshape(nb * T, HIDDEN1), wih_ref[...],
                 preferred_element_type=jnp.float32) + blstm_ref[...]
    xg = xg.reshape(nb, T, 4 * h2)

    h = jnp.zeros((nb, h2), jnp.float32)
    c = jnp.zeros((nb, h2), jnp.float32)
    for t in range(T):                                       # static unroll, T = L//4
        g = xg[:, t, :] + jnp.dot(h, whh_ref[...],
                                  preferred_element_type=jnp.float32)
        i = jax.nn.sigmoid(g[:, 0 * h2:1 * h2])              # PyTorch gate order i|f|g|o
        f = jax.nn.sigmoid(g[:, 1 * h2:2 * h2])
        gg = jnp.tanh(g[:, 2 * h2:3 * h2])
        o = jax.nn.sigmoid(g[:, 3 * h2:4 * h2])
        c = f * c + i * gg
        h = o * jnp.tanh(c)

    # ---- classifier heads on the last hidden state -------------------------
    z = jnp.dot(h, wfc_ref[...], preferred_element_type=jnp.float32) + bfc_ref[...]
    z = jnp.dot(z, wfc1_ref[...], preferred_element_type=jnp.float32) + bfc1_ref[...]
    out_ref[...] = z.astype(out_ref.dtype)


def cnn_lstm_forward(x, params, *, nb=None):
    """x: (B, L, INPUT_SIZE) float32  ->  (B, NUM_CLASSES) float32."""
    B, L, C = x.shape
    assert C == INPUT_SIZE and L % 4 == 0
    if nb is None:
        nb = B if B <= 512 else 512          # whole batch per program at small B
    grid = (pl.cdiv(B, nb),)

    weights = (
        params["w1"], params["b1"], params["w2"], params["b2"],
        params["wih"], params["whh"], params["b_lstm"],
        params["wfc"], params["bfc"], params["wfc1"], params["bfc1"],
    )
    full = lambda a: pl.BlockSpec(a.shape, lambda n: (0,) * a.ndim)

    return pl.pallas_call(
        cnn_lstm_kernel,
        out_shape=jax.ShapeDtypeStruct((B, NUM_CLASSES), jnp.float32),
        grid_spec=pltpu.PrefetchScalarGridSpec(
            num_scalar_prefetch=0,
            grid=grid,
            in_specs=[pl.BlockSpec((nb, L, C), lambda n: (n, 0, 0))]
                     + [full(w) for w in weights],
            out_specs=pl.BlockSpec((nb, NUM_CLASSES), lambda n: (n, 0)),
        ),
        compiler_params=pltpu.CompilerParams(
            dimension_semantics=("parallel",)),
    )(x, *weights)


def init_params(key):
    ks = jax.random.split(key, 11)
    u = lambda k, shape, s: jax.random.uniform(k, shape, jnp.float32, -s, s)
    s1 = (INPUT_SIZE * KSIZE) ** -0.5
    s2 = (CONV1_OUT * KSIZE) ** -0.5
    sl = HIDDEN2 ** -0.5
    sf = HIDDEN2 ** -0.5
    sf1 = FC_MID ** -0.5
    return {
        # Conv1d weights stored as (K, Cin, Cout) == transpose of PyTorch (Cout, Cin, K)
        "w1": u(ks[0], (KSIZE, INPUT_SIZE, CONV1_OUT), s1),
        "b1": u(ks[1], (1, CONV1_OUT), s1),
        "w2": u(ks[2], (KSIZE, CONV1_OUT, HIDDEN1), s2),
        "b2": u(ks[3], (1, HIDDEN1), s2),
        # LSTM weights stored transposed: (in, 4*H2); PyTorch gate order i|f|g|o
        "wih": u(ks[4], (HIDDEN1, 4 * HIDDEN2), sl),
        "whh": u(ks[5], (HIDDEN2, 4 * HIDDEN2), sl),
        "b_lstm": u(ks[6], (1, 4 * HIDDEN2), sl),          # = b_ih + b_hh folded
        # Linear heads stored transposed: (in, out)
        "wfc": u(ks[7], (HIDDEN2, FC_MID), sf),
        "bfc": u(ks[8], (1, FC_MID), sf),
        "wfc1": u(ks[9], (FC_MID, NUM_CLASSES), sf1),
        "bfc1": u(ks[10], (1, NUM_CLASSES), sf1),
    }


def reference_forward(x, p):
    """Pure-JAX/XLA reference of CNN_LSTM.forward (eval mode)."""
    def conv_relu_pool(x_blc, w, b):
        B, L, _ = x_blc.shape
        xp = jnp.pad(x_blc, ((0, 0), (1, 1), (0, 0)))
        y = sum(jnp.einsum('blc,co->blo', xp[:, k:k + L, :], w[k])
                for k in range(KSIZE)) + b
        y = jnp.maximum(y, 0.0)
        return jnp.maximum(y[:, 0::2, :], y[:, 1::2, :])

    y = conv_relu_pool(x, p["w1"], p["b1"])
    y = conv_relu_pool(y, p["w2"], p["b2"])
    B, T, _ = y.shape
    h = jnp.zeros((B, HIDDEN2), jnp.float32)
    c = jnp.zeros((B, HIDDEN2), jnp.float32)
    xg = jnp.einsum('bth,hg->btg', y, p["wih"]) + p["b_lstm"]
    for t in range(T):
        g = xg[:, t, :] + h @ p["whh"]
        i = jax.nn.sigmoid(g[:, 0:HIDDEN2])
        f = jax.nn.sigmoid(g[:, HIDDEN2:2 * HIDDEN2])
        gg = jnp.tanh(g[:, 2 * HIDDEN2:3 * HIDDEN2])
        o = jax.nn.sigmoid(g[:, 3 * HIDDEN2:4 * HIDDEN2])
        c = f * c + i * gg
        h = o * jnp.tanh(c)
    z = h @ p["wfc"] + p["bfc"]
    return z @ p["wfc1"] + p["bfc1"]


if __name__ == "__main__":
    key = jax.random.PRNGKey(0)
    k_x, k_p = jax.random.split(key)

    B, L = 2, 16    # batch=2, seq_len=16 -> CNN downsamples to T=4 LSTM steps
    x = jax.random.normal(k_x, (B, L, INPUT_SIZE), jnp.float32)
    params = init_params(k_p)

    out = cnn_lstm_forward(x, params)
    out = jax.block_until_ready(out)
    assert out.shape == (B, NUM_CLASSES)

    with jax.default_matmul_precision("highest"):
        ref = reference_forward(x, params)
    assert jnp.allclose(out, ref, rtol=1e-3, atol=1e-3), "mismatch vs reference"

    print("KERNEL_OK")
</pallas_src>

<mosaic_0001>
module attributes {stable_mosaic.version = 11 : i64} {
  func.func @cnn_lstm_kernel(%arg0: i32, %arg1: memref<2x16x4xf32, #tpu.memory_space<vmem>>, %arg2: memref<3x4x16xf32, #tpu.memory_space<vmem>>, %arg3: memref<1x16xf32, #tpu.memory_space<vmem>>, %arg4: memref<3x16x16xf32, #tpu.memory_space<vmem>>, %arg5: memref<1x16xf32, #tpu.memory_space<vmem>>, %arg6: memref<16x32xf32, #tpu.memory_space<vmem>>, %arg7: memref<8x32xf32, #tpu.memory_space<vmem>>, %arg8: memref<1x32xf32, #tpu.memory_space<vmem>>, %arg9: memref<8x4xf32, #tpu.memory_space<vmem>>, %arg10: memref<1x4xf32, #tpu.memory_space<vmem>>, %arg11: memref<4x12xf32, #tpu.memory_space<vmem>>, %arg12: memref<1x12xf32, #tpu.memory_space<vmem>>, %arg13: memref<2x12xf32, #tpu.memory_space<vmem>>) attributes {dimension_semantics = [#tpu.dimension_semantics<parallel>], iteration_bounds = array<i64: 1>, scalar_prefetch = 0 : i64, scratch_operands = 0 : i64, tpu.core_type = #tpu.core_type<tc>, window_params = [{transform_indices = @transform_0, window_bounds = array<i64: 2, 16, 4>}, {pipeline_mode = #tpu.pipeline_mode<synchronous>, transform_indices = @transform_1, window_bounds = array<i64: 3, 4, 16>}, {pipeline_mode = #tpu.pipeline_mode<synchronous>, transform_indices = @transform_2, window_bounds = array<i64: 1, 16>}, {pipeline_mode = #tpu.pipeline_mode<synchronous>, transform_indices = @transform_3, window_bounds = array<i64: 3, 16, 16>}, {pipeline_mode = #tpu.pipeline_mode<synchronous>, transform_indices = @transform_4, window_bounds = array<i64: 1, 16>}, {pipeline_mode = #tpu.pipeline_mode<synchronous>, transform_indices = @transform_5, window_bounds = array<i64: 16, 32>}, {pipeline_mode = #tpu.pipeline_mode<synchronous>, transform_indices = @transform_6, window_bounds = array<i64: 8, 32>}, {pipeline_mode = #tpu.pipeline_mode<synchronous>, transform_indices = @transform_7, window_bounds = array<i64: 1, 32>}, {pipeline_mode = #tpu.pipeline_mode<synchronous>, transform_indices = @transform_8, window_bounds = array<i64: 8, 4>}, {pipeline_mode = #tpu.pipeline_mode<synchronous>, transform_indices = @transform_9, window_bounds = array<i64: 1, 4>}, {pipeline_mode = #tpu.pipeline_mode<synchronous>, transform_indices = @transform_10, window_bounds = array<i64: 4, 12>}, {pipeline_mode = #tpu.pipeline_mode<synchronous>, transform_indices = @transform_11, window_bounds = array<i64: 1, 12>}, {transform_indices = @transform_12, window_bounds = array<i64: 2, 12>}]} {
    %c0 = arith.constant 0 : index
    %c0_0 = arith.constant 0 : index
    %c0_1 = arith.constant 0 : index
    %0 = vector.load %arg1[%c0, %c0_0, %c0_1] : memref<2x16x4xf32, #tpu.memory_space<vmem>>, vector<2x16x4xf32>
    %cst = arith.constant 0.000000e+00 : f32
    %1 = vector.broadcast %cst : f32 to vector<2x1x4xf32>
    %2 = tpu.concatenate %1, %0, %1 in 1 : vector<2x1x4xf32>, vector<2x16x4xf32>, vector<2x1x4xf32> -> vector<2x18x4xf32>
    %cst_2 = arith.constant 0.000000e+00 : f32
    %3 = vector.broadcast %cst_2 : f32 to vector<32x16xf32>
    %4 = vector.extract_strided_slice %2 {offsets = [0, 0, 0], sizes = [2, 16, 4], strides = [1, 1, 1]} : vector<2x18x4xf32> to vector<2x16x4xf32>
    %5 = vector.shape_cast %4 : vector<2x16x4xf32> to vector<32x4xf32>
    %c0_3 = arith.constant 0 : index
    %c0_4 = arith.constant 0 : index
    %c0_5 = arith.constant 0 : index
    %6 = vector.load %arg2[%c0_3, %c0_4, %c0_5] : memref<3x4x16xf32, #tpu.memory_space<vmem>>, vector<1x4x16xf32>
    %7 = vector.shape_cast %6 : vector<1x4x16xf32> to vector<4x16xf32>
    %cst_6 = arith.constant dense<0.000000e+00> : vector<32x16xf32>
    %8 = tpu.matmul %5, %7, %cst_6 {dimension_numbers = #tpu.dot_dimension_numbers<[1], [0], [0], [1], [0, 0, 1, 1], [], []>} : vector<32x4xf32>, vector<4x16xf32>, vector<32x16xf32> -> vector<32x16xf32>
    %9 = arith.addf %3, %8 : vector<32x16xf32>
    %10 = vector.extract_strided_slice %2 {offsets = [0, 1, 0], sizes = [2, 16, 4], strides = [1, 1, 1]} : vector<2x18x4xf32> to vector<2x16x4xf32>
    %11 = vector.shape_cast %10 : vector<2x16x4xf32> to vector<32x4xf32>
    %c1 = arith.constant 1 : index
    %c0_7 = arith.constant 0 : index
    %c0_8 = arith.constant 0 : index
    %12 = vector.load %arg2[%c1, %c0_7, %c0_8] : memref<3x4x16xf32, #tpu.memory_space<vmem>>, vector<1x4x16xf32>
    %13 = vector.shape_cast %12 : vector<1x4x16xf32> to vector<4x16xf32>
    %cst_9 = arith.constant dense<0.000000e+00> : vector<32x16xf32>
    %14 = tpu.matmul %11, %13, %cst_9 {dimension_numbers = #tpu.dot_dimension_numbers<[1], [0], [0], [1], [0, 0, 1, 1], [], []>} : vector<32x4xf32>, vector<4x16xf32>, vector<32x16xf32> -> vector<32x16xf32>
    %15 = arith.addf %9, %14 : vector<32x16xf32>
    %16 = vector.extract_strided_slice %2 {offsets = [0, 2, 0], sizes = [2, 16, 4], strides = [1, 1, 1]} : vector<2x18x4xf32> to vector<2x16x4xf32>
    %17 = vector.shape_cast %16 : vector<2x16x4xf32> to vector<32x4xf32>
    %c2 = arith.constant 2 : index
    %c0_10 = arith.constant 0 : index
    %c0_11 = arith.constant 0 : index
    %18 = vector.load %arg2[%c2, %c0_10, %c0_11] : memref<3x4x16xf32, #tpu.memory_space<vmem>>, vector<1x4x16xf32>
    %19 = vector.shape_cast %18 : vector<1x4x16xf32> to vector<4x16xf32>
    %cst_12 = arith.constant dense<0.000000e+00> : vector<32x16xf32>
    %20 = tpu.matmul %17, %19, %cst_12 {dimension_numbers = #tpu.dot_dimension_numbers<[1], [0], [0], [1], [0, 0, 1, 1], [], []>} : vector<32x4xf32>, vector<4x16xf32>, vector<32x16xf32> -> vector<32x16xf32>
    %21 = arith.addf %15, %20 : vector<32x16xf32>
    %c0_13 = arith.constant 0 : index
    %c0_14 = arith.constant 0 : index
    %22 = vector.load %arg3[%c0_13, %c0_14] : memref<1x16xf32, #tpu.memory_space<vmem>>, vector<1x16xf32>
    %23 = vector.broadcast %22 : vector<1x16xf32> to vector<32x16xf32>
    %24 = arith.addf %21, %23 : vector<32x16xf32>
    %cst_15 = arith.constant 0.000000e+00 : f32
    %25 = vector.broadcast %cst_15 : f32 to vector<32x16xf32>
    %26 = arith.maximumf %24, %25 : vector<32x16xf32>
    %27 = vector.shape_cast %26 : vector<32x16xf32> to vector<2x16x16xf32>
    %28 = vector.extract_strided_slice %27 {offsets = [0, 0, 0], sizes = [2, 1, 16], strides = [1, 1, 1]} : vector<2x16x16xf32> to vector<2x1x16xf32>
    %29 = vector.extract_strided_slice %27 {offsets = [0, 1, 0], sizes = [2, 1, 16], strides = [1, 1, 1]} : vector<2x16x16xf32> to vector<2x1x16xf32>
    %30 = arith.maximumf %28, %29 : vector<2x1x16xf32>
    %31 = vector.extract_strided_slice %27 {offsets = [0, 2, 0], sizes = [2, 1, 16], strides = [1, 1, 1]} : vector<2x16x16xf32> to vector<2x1x16xf32>
    %32 = vector.extract_strided_slice %27 {offsets = [0, 3, 0], sizes = [2, 1, 16], strides = [1, 1, 1]} : vector<2x16x16xf32> to vector<2x1x16xf32>
    %33 = arith.maximumf %31, %32 : vector<2x1x16xf32>
    %34 = vector.extract_strided_slice %27 {offsets = [0, 4, 0], sizes = [2, 1, 16], strides = [1, 1, 1]} : vector<2x16x16xf32> to vector<2x1x16xf32>
    %35 = vector.extract_strided_slice %27 {offsets = [0, 5, 0], sizes = [2, 1, 16], strides = [1, 1, 1]} : vector<2x16x16xf32> to vector<2x1x16xf32>
    %36 = arith.maximumf %34, %35 : vector<2x1x16xf32>
    %37 = vector.extract_strided_slice %27 {offsets = [0, 6, 0], sizes = [2, 1, 16], strides = [1, 1, 1]} : vector<2x16x16xf32> to vector<2x1x16xf32>
    %38 = vector.extract_strided_slice %27 {offsets = [0, 7, 0], sizes = [2, 1, 16], strides = [1, 1, 1]} : vector<2x16x16xf32> to vector<2x1x16xf32>
    %39 = arith.maximumf %37, %38 : vector<2x1x16xf32>
    %40 = vector.extract_strided_slice %27 {offsets = [0, 8, 0], sizes = [2, 1, 16], strides = [1, 1, 1]} : vector<2x16x16xf32> to vector<2x1x16xf32>
    %41 = vector.extract_strided_slice %27 {offsets = [0, 9, 0], sizes = [2, 1, 16], strides = [1, 1, 1]} : vector<2x16x16xf32> to vector<2x1x16xf32>
    %42 = arith.maximumf %40, %41 : vector<2x1x16xf32>
    %43 = vector.extract_strided_slice %27 {offsets = [0, 10, 0], sizes = [2, 1, 16], strides = [1, 1, 1]} : vector<2x16x16xf32> to vector<2x1x16xf32>
    %44 = vector.extract_strided_slice %27 {offsets = [0, 11, 0], sizes = [2, 1, 16], strides = [1, 1, 1]} : vector<2x16x16xf32> to vector<2x1x16xf32>
    %45 = arith.maximumf %43, %44 : vector<2x1x16xf32>
    %46 = vector.extract_strided_slice %27 {offsets = [0, 12, 0], sizes = [2, 1, 16], strides = [1, 1, 1]} : vector<2x16x16xf32> to vector<2x1x16xf32>
    %47 = vector.extract_strided_slice %27 {offsets = [0, 13, 0], sizes = [2, 1, 16], strides = [1, 1, 1]} : vector<2x16x16xf32> to vector<2x1x16xf32>
    %48 = arith.maximumf %46, %47 : vector<2x1x16xf32>
    %49 = vector.extract_strided_slice %27 {offsets = [0, 14, 0], sizes = [2, 1, 16], strides = [1, 1, 1]} : vector<2x16x16xf32> to vector<2x1x16xf32>
    %50 = vector.extract_strided_slice %27 {offsets = [0, 15, 0], sizes = [2, 1, 16], strides = [1, 1, 1]} : vector<2x16x16xf32> to vector<2x1x16xf32>
    %51 = arith.maximumf %49, %50 : vector<2x1x16xf32>
    %52 = tpu.concatenate %30, %33, %36, %39, %42, %45, %48, %51 in 1 : vector<2x1x16xf32>, vector<2x1x16xf32>, vector<2x1x16xf32>, vector<2x1x16xf32>, vector<2x1x16xf32>, vector<2x1x16xf32>, vector<2x1x16xf32>, vector<2x1x16xf32> -> vector<2x8x16xf32>
    %cst_16 = arith.constant 0.000000e+00 : f32
    %53 = vector.broadcast %cst_16 : f32 to vector<2x1x16xf32>
    %54 = tpu.concatenate %53, %52, %53 in 1 : vector<2x1x16xf32>, vector<2x8x16xf32>, vector<2x1x16xf32> -> vector<2x10x16xf32>
    %cst_17 = arith.constant 0.000000e+00 : f32
    %55 = vector.broadcast %cst_17 : f32 to vector<16x16xf32>
    %56 = vector.extract_strided_slice %54 {offsets = [0, 0, 0], sizes = [2, 8, 16], strides = [1, 1, 1]} : vector<2x10x16xf32> to vector<2x8x16xf32>
    %57 = vector.shape_cast %56 : vector<2x8x16xf32> to vector<16x16xf32>
    %c0_18 = arith.constant 0 : index
    %c0_19 = arith.constant 0 : index
    %c0_20 = arith.constant 0 : index
    %58 = vector.load %arg4[%c0_18, %c0_19, %c0_20] : memref<3x16x16xf32, #tpu.memory_space<vmem>>, vector<1x16x16xf32>
    %59 = vector.shape_cast %58 : vector<1x16x16xf32> to vector<16x16xf32>
    %cst_21 = arith.constant dense<0.000000e+00> : vector<16x16xf32>
    %60 = tpu.matmul %57, %59, %cst_21 {dimension_numbers = #tpu.dot_dimension_numbers<[1], [0], [0], [1], [0, 0, 1, 1], [], []>} : vector<16x16xf32>, vector<16x16xf32>, vector<16x16xf32> -> vector<16x16xf32>
    %61 = arith.addf %55, %60 : vector<16x16xf32>
    %62 = vector.extract_strided_slice %54 {offsets = [0, 1, 0], sizes = [2, 8, 16], strides = [1, 1, 1]} : vector<2x10x16xf32> to vector<2x8x16xf32>
    %63 = vector.shape_cast %62 : vector<2x8x16xf32> to vector<16x16xf32>
    %c1_22 = arith.constant 1 : index
    %c0_23 = arith.constant 0 : index
    %c0_24 = arith.constant 0 : index
    %64 = vector.load %arg4[%c1_22, %c0_23, %c0_24] : memref<3x16x16xf32, #tpu.memory_space<vmem>>, vector<1x16x16xf32>
    %65 = vector.shape_cast %64 : vector<1x16x16xf32> to vector<16x16xf32>
    %cst_25 = arith.constant dense<0.000000e+00> : vector<16x16xf32>
    %66 = tpu.matmul %63, %65, %cst_25 {dimension_numbers = #tpu.dot_dimension_numbers<[1], [0], [0], [1], [0, 0, 1, 1], [], []>} : vector<16x16xf32>, vector<16x16xf32>, vector<16x16xf32> -> vector<16x16xf32>
    %67 = arith.addf %61, %66 : vector<16x16xf32>
    %68 = vector.extract_strided_slice %54 {offsets = [0, 2, 0], sizes = [2, 8, 16], strides = [1, 1, 1]} : vector<2x10x16xf32> to vector<2x8x16xf32>
    %69 = vector.shape_cast %68 : vector<2x8x16xf32> to vector<16x16xf32>
    %c2_26 = arith.constant 2 : index
    %c0_27 = arith.constant 0 : index
    %c0_28 = arith.constant 0 : index
    %70 = vector.load %arg4[%c2_26, %c0_27, %c0_28] : memref<3x16x16xf32, #tpu.memory_space<vmem>>, vector<1x16x16xf32>
    %71 = vector.shape_cast %70 : vector<1x16x16xf32> to vector<16x16xf32>
    %cst_29 = arith.constant dense<0.000000e+00> : vector<16x16xf32>
    %72 = tpu.matmul %69, %71, %cst_29 {dimension_numbers = #tpu.dot_dimension_numbers<[1], [0], [0], [1], [0, 0, 1, 1], [], []>} : vector<16x16xf32>, vector<16x16xf32>, vector<16x16xf32> -> vector<16x16xf32>
    %73 = arith.addf %67, %72 : vector<16x16xf32>
    %c0_30 = arith.constant 0 : index
    %c0_31 = arith.constant 0 : index
    %74 = vector.load %arg5[%c0_30, %c0_31] : memref<1x16xf32, #tpu.memory_space<vmem>>, vector<1x16xf32>
    %75 = vector.broadcast %74 : vector<1x16xf32> to vector<16x16xf32>
    %76 = arith.addf %73, %75 : vector<16x16xf32>
    %cst_32 = arith.constant 0.000000e+00 : f32
    %77 = vector.broadcast %cst_32 : f32 to vector<16x16xf32>
    %78 = arith.maximumf %76, %77 : vector<16x16xf32>
    %79 = vector.shape_cast %78 : vector<16x16xf32> to vector<2x8x16xf32>
    %80 = vector.extract_strided_slice %79 {offsets = [0, 0, 0], sizes = [2, 1, 16], strides = [1, 1, 1]} : vector<2x8x16xf32> to vector<2x1x16xf32>
    %81 = vector.extract_strided_slice %79 {offsets = [0, 1, 0], sizes = [2, 1, 16], strides = [1, 1, 1]} : vector<2x8x16xf32> to vector<2x1x16xf32>
    %82 = arith.maximumf %80, %81 : vector<2x1x16xf32>
    %83 = vector.extract_strided_slice %79 {offsets = [0, 2, 0], sizes = [2, 1, 16], strides = [1, 1, 1]} : vector<2x8x16xf32> to vector<2x1x16xf32>
    %84 = vector.extract_strided_slice %79 {offsets = [0, 3, 0], sizes = [2, 1, 16], strides = [1, 1, 1]} : vector<2x8x16xf32> to vector<2x1x16xf32>
    %85 = arith.maximumf %83, %84 : vector<2x1x16xf32>
    %86 = vector.extract_strided_slice %79 {offsets = [0, 4, 0], sizes = [2, 1, 16], strides = [1, 1, 1]} : vector<2x8x16xf32> to vector<2x1x16xf32>
    %87 = vector.extract_strided_slice %79 {offsets = [0, 5, 0], sizes = [2, 1, 16], strides = [1, 1, 1]} : vector<2x8x16xf32> to vector<2x1x16xf32>
    %88 = arith.maximumf %86, %87 : vector<2x1x16xf32>
    %89 = vector.extract_strided_slice %79 {offsets = [0, 6, 0], sizes = [2, 1, 16], strides = [1, 1, 1]} : vector<2x8x16xf32> to vector<2x1x16xf32>
    %90 = vector.extract_strided_slice %79 {offsets = [0, 7, 0], sizes = [2, 1, 16], strides = [1, 1, 1]} : vector<2x8x16xf32> to vector<2x1x16xf32>
    %91 = arith.maximumf %89, %90 : vector<2x1x16xf32>
    %92 = tpu.concatenate %82, %85, %88, %91 in 1 : vector<2x1x16xf32>, vector<2x1x16xf32>, vector<2x1x16xf32>, vector<2x1x16xf32> -> vector<2x4x16xf32>
    %93 = vector.shape_cast %92 : vector<2x4x16xf32> to vector<8x16xf32>
    %c0_33 = arith.constant 0 : index
    %c0_34 = arith.constant 0 : index
    %94 = vector.load %arg6[%c0_33, %c0_34] : memref<16x32xf32, #tpu.memory_space<vmem>>, vector<16x32xf32>
    %cst_35 = arith.constant dense<0.000000e+00> : vector<8x32xf32>
    %95 = tpu.matmul %93, %94, %cst_35 {dimension_numbers = #tpu.dot_dimension_numbers<[1], [0], [0], [1], [0, 0, 1, 1], [], []>} : vector<8x16xf32>, vector<16x32xf32>, vector<8x32xf32> -> vector<8x32xf32>
    %c0_36 = arith.constant 0 : index
    %c0_37 = arith.constant 0 : index
    %96 = vector.load %arg8[%c0_36, %c0_37] : memref<1x32xf32, #tpu.memory_space<vmem>>, vector<1x32xf32>
    %97 = vector.broadcast %96 : vector<1x32xf32> to vector<8x32xf32>
    %98 = arith.addf %95, %97 : vector<8x32xf32>
    %99 = vector.shape_cast %98 : vector<8x32xf32> to vector<2x4x32xf32>
    %cst_38 = arith.constant 0.000000e+00 : f32
    %100 = vector.broadcast %cst_38 : f32 to vector<2x8xf32>
    %cst_39 = arith.constant 0.000000e+00 : f32
    %101 = vector.broadcast %cst_39 : f32 to vector<2x8xf32>
    %102 = vector.extract_strided_slice %99 {offsets = [0, 0, 0], sizes = [2, 1, 32], strides = [1, 1, 1]} : vector<2x4x32xf32> to vector<2x1x32xf32>
    %103 = vector.shape_cast %102 : vector<2x1x32xf32> to vector<2x32xf32>
    %c0_40 = arith.constant 0 : index
    %c0_41 = arith.constant 0 : index
    %104 = vector.load %arg7[%c0_40, %c0_41] : memref<8x32xf32, #tpu.memory_space<vmem>>, vector<8x32xf32>
    %cst_42 = arith.constant dense<0.000000e+00> : vector<2x32xf32>
    %105 = tpu.matmul %100, %104, %cst_42 {dimension_numbers = #tpu.dot_dimension_numbers<[1], [0], [0], [1], [0, 0, 1, 1], [], []>} : vector<2x8xf32>, vector<8x32xf32>, vector<2x32xf32> -> vector<2x32xf32>
    %106 = arith.addf %103, %105 : vector<2x32xf32>
    %107 = vector.extract_strided_slice %106 {offsets = [0, 0], sizes = [2, 8], strides = [1, 1]} : vector<2x32xf32> to vector<2x8xf32>
    %108 = arith.negf %107 : vector<2x8xf32>
    %109 = math.exp %108 : vector<2x8xf32>
    %cst_43 = arith.constant 1.000000e+00 : f32
    %110 = vector.broadcast %cst_43 : f32 to vector<2x8xf32>
    %111 = arith.addf %110, %109 : vector<2x8xf32>
    %112 = arith.divf %110, %111 : vector<2x8xf32>
    %113 = vector.extract_strided_slice %106 {offsets = [0, 8], sizes = [2, 8], strides = [1, 1]} : vector<2x32xf32> to vector<2x8xf32>
    %114 = arith.negf %113 : vector<2x8xf32>
    %115 = math.exp %114 : vector<2x8xf32>
    %cst_44 = arith.constant 1.000000e+00 : f32
    %116 = vector.broadcast %cst_44 : f32 to vector<2x8xf32>
    %117 = arith.addf %116, %115 : vector<2x8xf32>
    %118 = arith.divf %116, %117 : vector<2x8xf32>
    %119 = vector.extract_strided_slice %106 {offsets = [0, 16], sizes = [2, 8], strides = [1, 1]} : vector<2x32xf32> to vector<2x8xf32>
    %120 = math.tanh %119 : vector<2x8xf32>
    %121 = vector.extract_strided_slice %106 {offsets = [0, 24], sizes = [2, 8], strides = [1, 1]} : vector<2x32xf32> to vector<2x8xf32>
    %122 = arith.negf %121 : vector<2x8xf32>
    %123 = math.exp %122 : vector<2x8xf32>
    %cst_45 = arith.constant 1.000000e+00 : f32
    %124 = vector.broadcast %cst_45 : f32 to vector<2x8xf32>
    %125 = arith.addf %124, %123 : vector<2x8xf32>
    %126 = arith.divf %124, %125 : vector<2x8xf32>
    %127 = arith.mulf %118, %101 : vector<2x8xf32>
    %128 = arith.mulf %112, %120 : vector<2x8xf32>
    %129 = arith.addf %127, %128 : vector<2x8xf32>
    %130 = math.tanh %129 : vector<2x8xf32>
    %131 = arith.mulf %126, %130 : vector<2x8xf32>
    %132 = vector.extract_strided_slice %99 {offsets = [0, 1, 0], sizes = [2, 1, 32], strides = [1, 1, 1]} : vector<2x4x32xf32> to vector<2x1x32xf32>
    %133 = vector.shape_cast %132 : vector<2x1x32xf32> to vector<2x32xf32>
    %c0_46 = arith.constant 0 : index
    %c0_47 = arith.constant 0 : index
    %134 = vector.load %arg7[%c0_46, %c0_47] : memref<8x32xf32, #tpu.memory_space<vmem>>, vector<8x32xf32>
    %cst_48 = arith.constant dense<0.000000e+00> : vector<2x32xf32>
    %135 = tpu.matmul %131, %134, %cst_48 {dimension_numbers = #tpu.dot_dimension_numbers<[1], [0], [0], [1], [0, 0, 1, 1], [], []>} : vector<2x8xf32>, vector<8x32xf32>, vector<2x32xf32> -> vector<2x32xf32>
    %136 = arith.addf %133, %135 : vector<2x32xf32>
    %137 = vector.extract_strided_slice %136 {offsets = [0, 0], sizes = [2, 8], strides = [1, 1]} : vector<2x32xf32> to vector<2x8xf32>
    %138 = arith.negf %137 : vector<2x8xf32>
    %139 = math.exp %138 : vector<2x8xf32>
    %cst_49 = arith.constant 1.000000e+00 : f32
    %140 = vector.broadcast %cst_49 : f32 to vector<2x8xf32>
    %141 = arith.addf %140, %139 : vector<2x8xf32>
    %142 = arith.divf %140, %141 : vector<2x8xf32>
    %143 = vector.extract_strided_slice %136 {offsets = [0, 8], sizes = [2, 8], strides = [1, 1]} : vector<2x32xf32> to vector<2x8xf32>
    %144 = arith.negf %143 : vector<2x8xf32>
    %145 = math.exp %144 : vector<2x8xf32>
    %cst_50 = arith.constant 1.000000e+00 : f32
    %146 = vector.broadcast %cst_50 : f32 to vector<2x8xf32>
    %147 = arith.addf %146, %145 : vector<2x8xf32>
    %148 = arith.divf %146, %147 : vector<2x8xf32>
    %149 = vector.extract_strided_slice %136 {offsets = [0, 16], sizes = [2, 8], strides = [1, 1]} : vector<2x32xf32> to vector<2x8xf32>
    %150 = math.tanh %149 : vector<2x8xf32>
    %151 = vector.extract_strided_slice %136 {offsets = [0, 24], sizes = [2, 8], strides = [1, 1]} : vector<2x32xf32> to vector<2x8xf32>
    %152 = arith.negf %151 : vector<2x8xf32>
    %153 = math.exp %152 : vector<2x8xf32>
    %cst_51 = arith.constant 1.000000e+00 : f32
    %154 = vector.broadcast %cst_51 : f32 to vector<2x8xf32>
    %155 = arith.addf %154, %153 : vector<2x8xf32>
    %156 = arith.divf %154, %155 : vector<2x8xf32>
    %157 = arith.mulf %148, %129 : vector<2x8xf32>
    %158 = arith.mulf %142, %150 : vector<2x8xf32>
    %159 = arith.addf %157, %158 : vector<2x8xf32>
    %160 = math.tanh %159 : vector<2x8xf32>
    %161 = arith.mulf %156, %160 : vector<2x8xf32>
    %162 = vector.extract_strided_slice %99 {offsets = [0, 2, 0], sizes = [2, 1, 32], strides = [1, 1, 1]} : vector<2x4x32xf32> to vector<2x1x32xf32>
    %163 = vector.shape_cast %162 : vector<2x1x32xf32> to vector<2x32xf32>
    %c0_52 = arith.constant 0 : index
    %c0_53 = arith.constant 0 : index
    %164 = vector.load %arg7[%c0_52, %c0_53] : memref<8x32xf32, #tpu.memory_space<vmem>>, vector<8x32xf32>
    %cst_54 = arith.constant dense<0.000000e+00> : vector<2x32xf32>
    %165 = tpu.matmul %161, %164, %cst_54 {dimension_numbers = #tpu.dot_dimension_numbers<[1], [0], [0], [1], [0, 0, 1, 1], [], []>} : vector<2x8xf32>, vector<8x32xf32>, vector<2x32xf32> -> vector<2x32xf32>
    %166 = arith.addf %163, %165 : vector<2x32xf32>
    %167 = vector.extract_strided_slice %166 {offsets = [0, 0], sizes = [2, 8], strides = [1, 1]} : vector<2x32xf32> to vector<2x8xf32>
    %168 = arith.negf %167 : vector<2x8xf32>
    %169 = math.exp %168 : vector<2x8xf32>
    %cst_55 = arith.constant 1.000000e+00 : f32
    %170 = vector.broadcast %cst_55 : f32 to vector<2x8xf32>
    %171 = arith.addf %170, %169 : vector<2x8xf32>
    %172 = arith.divf %170, %171 : vector<2x8xf32>
    %173 = vector.extract_strided_slice %166 {offsets = [0, 8], sizes = [2, 8], strides = [1, 1]} : vector<2x32xf32> to vector<2x8xf32>
    %174 = arith.negf %173 : vector<2x8xf32>
    %175 = math.exp %174 : vector<2x8xf32>
    %cst_56 = arith.constant 1.000000e+00 : f32
    %176 = vector.broadcast %cst_56 : f32 to vector<2x8xf32>
    %177 = arith.addf %176, %175 : vector<2x8xf32>
    %178 = arith.divf %176, %177 : vector<2x8xf32>
    %179 = vector.extract_strided_slice %166 {offsets = [0, 16], sizes = [2, 8], strides = [1, 1]} : vector<2x32xf32> to vector<2x8xf32>
    %180 = math.tanh %179 : vector<2x8xf32>
    %181 = vector.extract_strided_slice %166 {offsets = [0, 24], sizes = [2, 8], strides = [1, 1]} : vector<2x32xf32> to vector<2x8xf32>
    %182 = arith.negf %181 : vector<2x8xf32>
    %183 = math.exp %182 : vector<2x8xf32>
    %cst_57 = arith.constant 1.000000e+00 : f32
    %184 = vector.broadcast %cst_57 : f32 to vector<2x8xf32>
    %185 = arith.addf %184, %183 : vector<2x8xf32>
    %186 = arith.divf %184, %185 : vector<2x8xf32>
    %187 = arith.mulf %178, %159 : vector<2x8xf32>
    %188 = arith.mulf %172, %180 : vector<2x8xf32>
    %189 = arith.addf %187, %188 : vector<2x8xf32>
    %190 = math.tanh %189 : vector<2x8xf32>
    %191 = arith.mulf %186, %190 : vector<2x8xf32>
    %192 = vector.extract_strided_slice %99 {offsets = [0, 3, 0], sizes = [2, 1, 32], strides = [1, 1, 1]} : vector<2x4x32xf32> to vector<2x1x32xf32>
    %193 = vector.shape_cast %192 : vector<2x1x32xf32> to vector<2x32xf32>
    %c0_58 = arith.constant 0 : index
    %c0_59 = arith.constant 0 : index
    %194 = vector.load %arg7[%c0_58, %c0_59] : memref<8x32xf32, #tpu.memory_space<vmem>>, vector<8x32xf32>
    %cst_60 = arith.constant dense<0.000000e+00> : vector<2x32xf32>
    %195 = tpu.matmul %191, %194, %cst_60 {dimension_numbers = #tpu.dot_dimension_numbers<[1], [0], [0], [1], [0, 0, 1, 1], [], []>} : vector<2x8xf32>, vector<8x32xf32>, vector<2x32xf32> -> vector<2x32xf32>
    %196 = arith.addf %193, %195 : vector<2x32xf32>
    %197 = vector.extract_strided_slice %196 {offsets = [0, 0], sizes = [2, 8], strides = [1, 1]} : vector<2x32xf32> to vector<2x8xf32>
    %198 = arith.negf %197 : vector<2x8xf32>
    %199 = math.exp %198 : vector<2x8xf32>
    %cst_61 = arith.constant 1.000000e+00 : f32
    %200 = vector.broadcast %cst_61 : f32 to vector<2x8xf32>
    %201 = arith.addf %200, %199 : vector<2x8xf32>
    %202 = arith.divf %200, %201 : vector<2x8xf32>
    %203 = vector.extract_strided_slice %196 {offsets = [0, 8], sizes = [2, 8], strides = [1, 1]} : vector<2x32xf32> to vector<2x8xf32>
    %204 = arith.negf %203 : vector<2x8xf32>
    %205 = math.exp %204 : vector<2x8xf32>
    %cst_62 = arith.constant 1.000000e+00 : f32
    %206 = vector.broadcast %cst_62 : f32 to vector<2x8xf32>
    %207 = arith.addf %206, %205 : vector<2x8xf32>
    %208 = arith.divf %206, %207 : vector<2x8xf32>
    %209 = vector.extract_strided_slice %196 {offsets = [0, 16], sizes = [2, 8], strides = [1, 1]} : vector<2x32xf32> to vector<2x8xf32>
    %210 = math.tanh %209 : vector<2x8xf32>
    %211 = vector.extract_strided_slice %196 {offsets = [0, 24], sizes = [2, 8], strides = [1, 1]} : vector<2x32xf32> to vector<2x8xf32>
    %212 = arith.negf %211 : vector<2x8xf32>
    %213 = math.exp %212 : vector<2x8xf32>
    %cst_63 = arith.constant 1.000000e+00 : f32
    %214 = vector.broadcast %cst_63 : f32 to vector<2x8xf32>
    %215 = arith.addf %214, %213 : vector<2x8xf32>
    %216 = arith.divf %214, %215 : vector<2x8xf32>
    %217 = arith.mulf %208, %189 : vector<2x8xf32>
    %218 = arith.mulf %202, %210 : vector<2x8xf32>
    %219 = arith.addf %217, %218 : vector<2x8xf32>
    %220 = math.tanh %219 : vector<2x8xf32>
    %221 = arith.mulf %216, %220 : vector<2x8xf32>
    %c0_64 = arith.constant 0 : index
    %c0_65 = arith.constant 0 : index
    %222 = vector.load %arg9[%c0_64, %c0_65] : memref<8x4xf32, #tpu.memory_space<vmem>>, vector<8x4xf32>
    %cst_66 = arith.constant dense<0.000000e+00> : vector<2x4xf32>
    %223 = tpu.matmul %221, %222, %cst_66 {dimension_numbers = #tpu.dot_dimension_numbers<[1], [0], [0], [1], [0, 0, 1, 1], [], []>} : vector<2x8xf32>, vector<8x4xf32>, vector<2x4xf32> -> vector<2x4xf32>
    %c0_67 = arith.constant 0 : index
    %c0_68 = arith.constant 0 : index
    %224 = vector.load %arg10[%c0_67, %c0_68] : memref<1x4xf32, #tpu.memory_space<vmem>>, vector<1x4xf32>
    %225 = vector.broadcast %224 : vector<1x4xf32> to vector<2x4xf32>
    %226 = arith.addf %223, %225 : vector<2x4xf32>
    %c0_69 = arith.constant 0 : index
    %c0_70 = arith.constant 0 : index
    %227 = vector.load %arg11[%c0_69, %c0_70] : memref<4x12xf32, #tpu.memory_space<vmem>>, vector<4x12xf32>
    %cst_71 = arith.constant dense<0.000000e+00> : vector<2x12xf32>
    %228 = tpu.matmul %226, %227, %cst_71 {dimension_numbers = #tpu.dot_dimension_numbers<[1], [0], [0], [1], [0, 0, 1, 1], [], []>} : vector<2x4xf32>, vector<4x12xf32>, vector<2x12xf32> -> vector<2x12xf32>
    %c0_72 = arith.constant 0 : index
    %c0_73 = arith.constant 0 : index
    %229 = vector.load %arg12[%c0_72, %c0_73] : memref<1x12xf32, #tpu.memory_space<vmem>>, vector<1x12xf32>
    %230 = vector.broadcast %229 : vector<1x12xf32> to vector<2x12xf32>
    %231 = arith.addf %228, %230 : vector<2x12xf32>
    %c0_74 = arith.constant 0 : index
    %c0_75 = arith.constant 0 : index
    %232 = vector.load %arg13[%c0_74, %c0_75] : memref<2x12xf32, #tpu.memory_space<vmem>>, vector<2x12xf32>
    tpu.vector_store %arg13[%c0_74, %c0_75], %231 {strides = array<i32>} : memref<2x12xf32, #tpu.memory_space<vmem>>, vector<2x12xf32>,
    return
  }
  func.func @transform_0(%arg0: i32) -> (i32, i32, i32) {
    %c0_i32 = arith.constant 0 : i32
    %c0_i32_0 = arith.constant 0 : i32
    %c0_i32_1 = arith.constant 0 : i32
    return %arg0, %c0_i32, %c0_i32_0 : i32, i32, i32
  }
  func.func @transform_1(%arg0: i32) -> (i32, i32, i32) {
    %c0_i32 = arith.constant 0 : i32
    %c0_i32_0 = arith.constant 0 : i32
    %c0_i32_1 = arith.constant 0 : i32
    %c0_i32_2 = arith.constant 0 : i32
    return %c0_i32, %c0_i32_0, %c0_i32_1 : i32, i32, i32
  }
  func.func @transform_2(%arg0: i32) -> (i32, i32) {
    %c0_i32 = arith.constant 0 : i32
    %c0_i32_0 = arith.constant 0 : i32
    %c0_i32_1 = arith.constant 0 : i32
    return %c0_i32, %c0_i32_0 : i32, i32
  }
  func.func @transform_3(%arg0: i32) -> (i32, i32, i32) {
    %c0_i32 = arith.constant 0 : i32
    %c0_i32_0 = arith.constant 0 : i32
    %c0_i32_1 = arith.constant 0 : i32
    %c0_i32_2 = arith.constant 0 : i32
    return %c0_i32, %c0_i32_0, %c0_i32_1 : i32, i32, i32
  }
  func.func @transform_4(%arg0: i32) -> (i32, i32) {
    %c0_i32 = arith.constant 0 : i32
    %c0_i32_0 = arith.constant 0 : i32
    %c0_i32_1 = arith.constant 0 : i32
    return %c0_i32, %c0_i32_0 : i32, i32
  }
  func.func @transform_5(%arg0: i32) -> (i32, i32) {
    %c0_i32 = arith.constant 0 : i32
    %c0_i32_0 = arith.constant 0 : i32
    %c0_i32_1 = arith.constant 0 : i32
    return %c0_i32, %c0_i32_0 : i32, i32
  }
  func.func @transform_6(%arg0: i32) -> (i32, i32) {
    %c0_i32 = arith.constant 0 : i32
    %c0_i32_0 = arith.constant 0 : i32
    %c0_i32_1 = arith.constant 0 : i32
    return %c0_i32, %c0_i32_0 : i32, i32
  }
  func.func @transform_7(%arg0: i32) -> (i32, i32) {
    %c0_i32 = arith.constant 0 : i32
    %c0_i32_0 = arith.constant 0 : i32
    %c0_i32_1 = arith.constant 0 : i32
    return %c0_i32, %c0_i32_0 : i32, i32
  }
  func.func @transform_8(%arg0: i32) -> (i32, i32) {
    %c0_i32 = arith.constant 0 : i32
    %c0_i32_0 = arith.constant 0 : i32
    %c0_i32_1 = arith.constant 0 : i32
    return %c0_i32, %c0_i32_0 : i32, i32
  }
  func.func @transform_9(%arg0: i32) -> (i32, i32) {
    %c0_i32 = arith.constant 0 : i32
    %c0_i32_0 = arith.constant 0 : i32
    %c0_i32_1 = arith.constant 0 : i32
    return %c0_i32, %c0_i32_0 : i32, i32
  }
  func.func @transform_10(%arg0: i32) -> (i32, i32) {
    %c0_i32 = arith.constant 0 : i32
    %c0_i32_0 = arith.constant 0 : i32
    %c0_i32_1 = arith.constant 0 : i32
    return %c0_i32, %c0_i32_0 : i32, i32
  }
  func.func @transform_11(%arg0: i32) -> (i32, i32) {
    %c0_i32 = arith.constant 0 : i32
    %c0_i32_0 = arith.constant 0 : i32
    %c0_i32_1 = arith.constant 0 : i32
    return %c0_i32, %c0_i32_0 : i32, i32
  }
  func.func @transform_12(%arg0: i32) -> (i32, i32) {
    %c0_i32 = arith.constant 0 : i32
    %c0_i32_0 = arith.constant 0 : i32
    return %arg0, %c0_i32 : i32, i32
  }
}

</mosaic_0001>

<llo_original>
// kernel: tpu_custom_call.1
$region0: #{tpu_custom_call.1}
  #allocation0 [shape = 'u32[]', space=smem, size = 0x4, offset = 0x4, fixed_abs, tag = 'smem constant byte address 0x4 - core index']
  #allocation1 [shape = 'u32[72,128]{1,0:T(1,128)}', space=vmem, size = 0x9000, scoped, tag = 'internal scratch']
  %s0 = inlined_call_operand.vmem [shape: f32[2,16,4], index: 0, kind: input, shape index: {}]
  %s1 = inlined_call_operand.vmem [shape: f32[3,4,16], index: 1, kind: input, shape index: {}]
  %s2 = inlined_call_operand.vmem [shape: f32[1,16], index: 2, kind: input, shape index: {}]
  %s3 = inlined_call_operand.hbm [shape: f32[3,16,16], index: 3, kind: input, shape index: {}]
  %s4 = inlined_call_operand.vmem [shape: f32[1,16], index: 4, kind: input, shape index: {}]
  %s5 = inlined_call_operand.vmem [shape: f32[16,32], index: 5, kind: input, shape index: {}]
  %s6 = inlined_call_operand.vmem [shape: f32[8,32], index: 6, kind: input, shape index: {}]
  %s7 = inlined_call_operand.vmem [shape: f32[1,32], index: 7, kind: input, shape index: {}]
  %s8 = inlined_call_operand.vmem [shape: f32[8,4], index: 8, kind: input, shape index: {}]
  %s9 = inlined_call_operand.vmem [shape: f32[1,4], index: 9, kind: input, shape index: {}]
  %s10 = inlined_call_operand.vmem [shape: f32[4,12], index: 10, kind: input, shape index: {}]
  %s11 = inlined_call_operand.vmem [shape: f32[1,12], index: 11, kind: input, shape index: {}]
  %s12 = inlined_call_operand.hbm [shape: f32[2,12], index: 12, kind: output, shape index: {}]
  %s13 = sld [smem:[#allocation0]]
  $region62: #{tpu_custom_call.1} parent=0
    _
  %s15 = ssub.s32 1, %s13
  %s16 = scalar_select 0, %s15, %s13
  $region1: #{tpu_custom_call.1} parent=0
    #allocation2 [shape = 'u8[24576]{0}', space=vmem, size = 0x6000, scoped, tag = 'input window, operand 3, single buffered']
    #allocation3 [shape = 's32[1]{0}', space=sflag, size = 0x4, scoped, tag = 'scoped memory for tpu_custom_call.1']
    #allocation4 [shape = 's32[1]{0}', space=sflag, size = 0x4, scoped, tag = 'scoped memory for tpu_custom_call.1']
    #allocation5 [shape = 'u8[1024]{0}', space=vmem, size = 0x400, scoped, tag = 'output window, operand 0, single buffered']
    %17 = vsyncpa [#allocation3], 0
    %18 = vsyncpa [#allocation4], 0
    // Predicated region
    $region2: #{tpu_custom_call.1} parent=1 // pred_check
      _
    $region3: #{tpu_custom_call.1} parent=1 // pred_check_branch
      %20 = sbr.rel (0) target = $region5
    $region4: #{tpu_custom_call.1} parent=1 // pred_region
      _
    $region5: #{tpu_custom_call.1} parent=1 // pred_fallthru
      _
    // Predicated region
    $region6: #{tpu_custom_call.1} parent=1 // pred_check
      _
    $region7: #{tpu_custom_call.1} parent=1 // pred_check_branch
      %22 = sbr.rel (0) target = $region9
    $region8: #{tpu_custom_call.1} parent=1 // pred_region
      _
    $region9: #{tpu_custom_call.1} parent=1 // pred_fallthru
      _
    // Predicated region
    $region10: #{tpu_custom_call.1} parent=1 // pred_check
      _
    $region11: #{tpu_custom_call.1} parent=1 // pred_check_branch
      %24 = sbr.rel (0) target = $region13
    $region12: #{tpu_custom_call.1} parent=1 // pred_region
      _
    $region13: #{tpu_custom_call.1} parent=1 // pred_fallthru
      _
    // Predicated region
    $region14: #{tpu_custom_call.1} parent=1 // pred_check
      _
    $region15: #{tpu_custom_call.1} parent=1 // pred_check_branch
      %26 = sbr.rel (0) target = $region17
    $region16: #{tpu_custom_call.1} parent=1 // pred_region
      %28 = vsyncadd [#allocation3], 0
      %s29 = sshll.u32 %s3, 4
      %s30 = int_to_ptr.hbm [resolvable:$true] %s29
      %s31 = sshll.u32 [#allocation2], 4
      %s32 = int_to_ptr.vmem [resolvable:$true] %s31
      %37 = dma.hbm_to_vmem [thread:$0]  %s30, 768, %s32, [#allocation3], 128, 128, 8
    $region17: #{tpu_custom_call.1} parent=1 // pred_fallthru
      _
    // Predicated region
    $region18: #{tpu_custom_call.1} parent=1 // pred_check
      _
    $region19: #{tpu_custom_call.1} parent=1 // pred_check_branch
      %39 = sbr.rel (0) target = $region21
    $region20: #{tpu_custom_call.1} parent=1 // pred_region
      _
    $region21: #{tpu_custom_call.1} parent=1 // pred_fallthru
      _
    // Predicated region
    $region22: #{tpu_custom_call.1} parent=1 // pred_check
      _
    $region23: #{tpu_custom_call.1} parent=1 // pred_check_branch
      %41 = sbr.rel (0) target = $region25
    $region24: #{tpu_custom_call.1} parent=1 // pred_region
      _
    $region25: #{tpu_custom_call.1} parent=1 // pred_fallthru
      _
    // Predicated region
    $region26: #{tpu_custom_call.1} parent=1 // pred_check
      _
    $region27: #{tpu_custom_call.1} parent=1 // pred_check_branch
      %43 = sbr.rel (0) target = $region29
    $region28: #{tpu_custom_call.1} parent=1 // pred_region
      _
    $region29: #{tpu_custom_call.1} parent=1 // pred_fallthru
      _
    // Predicated region
    $region30: #{tpu_custom_call.1} parent=1 // pred_check
      _
    $region31: #{tpu_custom_call.1} parent=1 // pred_check_branch
      %45 = sbr.rel (0) target = $region33
    $region32: #{tpu_custom_call.1} parent=1 // pred_region
      _
    $region33: #{tpu_custom_call.1} parent=1 // pred_fallthru
      _
    // Predicated region
    $region34: #{tpu_custom_call.1} parent=1 // pred_check
      _
    $region35: #{tpu_custom_call.1} parent=1 // pred_check_branch
      %47 = sbr.rel (0) target = $region37
    $region36: #{tpu_custom_call.1} parent=1 // pred_region
      _
    $region37: #{tpu_custom_call.1} parent=1 // pred_fallthru
      _
    // Predicated region
    $region38: #{tpu_custom_call.1} parent=1 // pred_check
      _
    $region39: #{tpu_custom_call.1} parent=1 // pred_check_branch
      %49 = sbr.rel (0) target = $region41
    $region40: #{tpu_custom_call.1} parent=1 // pred_region
      _
    $region41: #{tpu_custom_call.1} parent=1 // pred_fallthru
      _
    // Predicated region
    $region42: #{tpu_custom_call.1} parent=1 // pred_check
      _
    $region43: #{tpu_custom_call.1} parent=1 // pred_check_branch
      %51 = sbr.rel (0) target = $region45
    $region44: #{tpu_custom_call.1} parent=1 // pred_region
      _
    $region45: #{tpu_custom_call.1} parent=1 // pred_fallthru
      _
    // Predicated region
    $region46: #{tpu_custom_call.1} parent=1 // pred_check
      _
    $region47: #{tpu_custom_call.1} parent=1 // pred_check_branch
      %53 = sbr.rel (0) target = $region49
    $region48: #{tpu_custom_call.1} parent=1 // pred_region
      _
    $region49: #{tpu_custom_call.1} parent=1 // pred_fallthru
      _
    // Predicated region
    $region50: #{tpu_custom_call.1} parent=1 // pred_check
      _
    $region51: #{tpu_custom_call.1} parent=1 // pred_check_branch
      %55 = sbr.rel (0) target = $region53
    $region52: #{tpu_custom_call.1} parent=1 // pred_region
      %57 = dma.done [#allocation3], 768
    $region53: #{tpu_custom_call.1} parent=1 // pred_fallthru
      _
    %v58 = vld [vmem:[%s0] sm:$0xff]
    %v59 = vld [vmem:[%s0 + $0x8] sm:$0xff]
    %v60 = vld [vmem:[%s0 + $0x10] sm:$0xff]
    %v61 = vld [vmem:[%s0 + $0x18] sm:$0xff]
    %vm66 = vcmask 1040384
    %v67 = vrot.slane %v58, 7
    %v68 = vrot.slane %v59, 7
    %v69 = vsel %vm66, %v67, %v68
    %v70 = vrot.slane %v60, 7
    %v71 = vrot.slane %v61, 7
    %v72 = vsel %vm66, %v70, %v71
    %v77 = vsel %vm66, 0.0, %v67
    %v78 = vsel %vm66, 0.0, %v70
    %v79 = vsel %vm66, %v68, 0.0
    %v80 = vsel %vm66, %v71, 0.0
    %v81 = vld [vmem:[%s1] sm:$0xf]
    %vm86 = vcmask 1046528
    %v87 = vrot.slane %v77, 1
    %v88 = vrot.slane %v69, 1
    %v89 = vsel %vm86, %v87, %v88
    %v90 = vrot.slane %v79, 1
    %v91 = vsel %vm86, %v88, %v90
    %v92 = vrot.slane %v78, 1
    %v93 = vrot.slane %v72, 1
    %v94 = vsel %vm86, %v92, %v93
    %v95 = vrot.slane %v80, 1
    %v96 = vsel %vm86, %v93, %v95
    %s97 = scalar_lea.vmem %s1, 4
    %v98 = vld [vmem:[%s97] sm:$0xf]
    %vm99 = vcmask 31744
    %v100 = vsel %vm99, %v89, 0
    %v102 = vsel %vm99, %v91, 0
    %v104 = vsel %vm99, %v94, 0
    %v106 = vsel %vm99, %v96, 0
    %vm108 = vcmask 1043456
    %v110 = vsel %vm108, %v98, 0
    %112 = vmatpush.msra.mxu0 0.0
    %113 = vmatpush.msra.mxu0 0.0
    %114 = vmatpush.msra.mxu0 0.0
    %115 = vmatpush.msra.mxu0 0.0
    %116 = vmatpush.msra.mxu0 0.0
    %117 = vmatpush.msra.mxu0 0.0
    %118 = vmatpush.msra.mxu0 0.0
    %119 = vmatpush.msra.mxu0 0.0
    %120 = vmatpush.msra.mxu0 0.0
    %121 = vmatpush.msra.mxu0 0.0
    %122 = vmatpush.msra.mxu0 0.0
    %123 = vmatpush.msra.mxu0 0.0
    %124 = vmatpush.msra.mxu0 0.0
    %125 = vmatpush.msra.mxu0 0.0
    %126 = vmatpush.msra.mxu0 0.0
    %127 = vmatpush.msra.mxu0 %v110
    %128 = vmatmul.f32.gmra.mxu0 %v100
    %v129 = vpop.f32.mrf.mxu0
    %v130 = vadd.f32 0.0, %v129
    %131 = vmatmul.f32.gmra.mxu0 %v102
    %v132 = vpop.f32.mrf.mxu0
    %v133 = vadd.f32 0.0, %v132
    %134 = vmatmul.f32.gmra.mxu0 %v104
    %v135 = vpop.f32.mrf.mxu0
    %v136 = vadd.f32 0.0, %v135
    %137 = vmatmul.f32.gmra.mxu0 %v106
    %v138 = vpop.f32.mrf.mxu0
    %v139 = vadd.f32 0.0, %v138
    %140 = vdwg.mxu0
    %v141 = vsel %vm99, %v77, 0
    %v143 = vsel %vm99, %v69, 0
    %v145 = vsel %vm99, %v78, 0
    %v147 = vsel %vm99, %v72, 0
    %v150 = vsel %vm108, %v81, 0
    %152 = vmatpush.msra.mxu0 0.0
    %153 = vmatpush.msra.mxu0 0.0
    %154 = vmatpush.msra.mxu0 0.0
    %155 = vmatpush.msra.mxu0 0.0
    %156 = vmatpush.msra.mxu0 0.0
    %157 = vmatpush.msra.mxu0 0.0
    %158 = vmatpush.msra.mxu0 0.0
    %159 = vmatpush.msra.mxu0 0.0
    %160 = vmatpush.msra.mxu0 0.0
    %161 = vmatpush.msra.mxu0 0.0
    %162 = vmatpush.msra.mxu0 0.0
    %163 = vmatpush.msra.mxu0 0.0
    %164 = vmatpush.msra.mxu0 0.0
    %165 = vmatpush.msra.mxu0 0.0
    %166 = vmatpush.msra.mxu0 0.0
    %167 = vmatpush.msra.mxu0 %v150
    %168 = vmatmul.f32.gmra.mxu0 %v141
    %v169 = vpop.f32.mrf.mxu0
    %v170 = vadd.f32 %v130, %v169
    %171 = vmatmul.f32.gmra.mxu0 %v143
    %v172 = vpop.f32.mrf.mxu0
    %v173 = vadd.f32 %v133, %v172
    %174 = vmatmul.f32.gmra.mxu0 %v145
    %v175 = vpop.f32.mrf.mxu0
    %v176 = vadd.f32 %v136, %v175
    %177 = vmatmul.f32.gmra.mxu0 %v147
    %v178 = vpop.f32.mrf.mxu0
    %v179 = vadd.f32 %v139, %v178
    %180 = vdwg.mxu0
    %vm181 = vcmask 1045504
    %v182 = vrot.slane %v77, 2
    %v183 = vrot.slane %v69, 2
    %v184 = vsel %vm181, %v182, %v183
    %v185 = vrot.slane %v79, 2
    %v186 = vsel %vm181, %v183, %v185
    %v187 = vrot.slane %v78, 2
    %v188 = vrot.slane %v72, 2
    %v189 = vsel %vm181, %v187, %v188
    %v190 = vrot.slane %v80, 2
    %v191 = vsel %vm181, %v188, %v190
    %s192 = scalar_lea.vmem %s1, 8
    %v193 = vld [vmem:[%s192] sm:$0xf]
    %v194 = vsel %vm99, %v184, 0
    %v196 = vsel %vm99, %v186, 0
    %v198 = vsel %vm99, %v189, 0
    %v200 = vsel %vm99, %v191, 0
    %v203 = vsel %vm108, %v193, 0
    %205 = vmatpush.msra.mxu0 0.0
    %206 = vmatpush.msra.mxu0 0.0
    %207 = vmatpush.msra.mxu0 0.0
    %208 = vmatpush.msra.mxu0 0.0
    %209 = vmatpush.msra.mxu0 0.0
    %210 = vmatpush.msra.mxu0 0.0
    %211 = vmatpush.msra.mxu0 0.0
    %212 = vmatpush.msra.mxu0 0.0
    %213 = vmatpush.msra.mxu0 0.0
    %214 = vmatpush.msra.mxu0 0.0
    %215 = vmatpush.msra.mxu0 0.0
    %216 = vmatpush.msra.mxu0 0.0
    %217 = vmatpush.msra.mxu0 0.0
    %218 = vmatpush.msra.mxu0 0.0
    %219 = vmatpush.msra.mxu0 0.0
    %220 = vmatpush.msra.mxu0 %v203
    %221 = vmatmul.f32.gmra.mxu0 %v194
    %v222 = vpop.f32.mrf.mxu0
    %v223 = vadd.f32 0.0, %v222
    %224 = vmatmul.f32.gmra.mxu0 %v196
    %v225 = vpop.f32.mrf.mxu0
    %v226 = vadd.f32 0.0, %v225
    %227 = vmatmul.f32.gmra.mxu0 %v198
    %v228 = vpop.f32.mrf.mxu0
    %v229 = vadd.f32 0.0, %v228
    %230 = vmatmul.f32.gmra.mxu0 %v200
    %v231 = vpop.f32.mrf.mxu0
    %v232 = vadd.f32 0.0, %v231
    %233 = vdwg.mxu0
    %v234 = vadd.f32 %v170, %v223
    %v235 = vadd.f32 %v173, %v226
    %v236 = vadd.f32 %v176, %v229
    %v237 = vadd.f32 %v179, %v232
    %v238 = vld [vmem:[%s2] sm:$0x1]
    %v240 = vperm.slane %v238, 0
    %v242 = vadd.f32 %v234, %v240
    %v243 = vadd.f32 %v235, %v240
    %v244 = vadd.f32 %v236, %v240
    %v245 = vadd.f32 %v237, %v240
    %v246 = vmax.f32 %v242, 0.0
    %v247 = vmax.f32 %v243, 0.0
    %v248 = vmax.f32 %v244, 0.0
    %v249 = vmax.f32 %v245, 0.0
    %v252 = vrot.slane %v246, 1
    %v253 = vrot.slane %v248, 1
    %v256 = vmax.f32 %v246, %v252
    %v257 = vmax.f32 %v248, %v253
    %v260 = vrot.slane %v247, 1
    %v261 = vrot.slane %v249, 1
    %v264 = vmax.f32 %v247, %v260
    %v265 = vmax.f32 %v249, %v261
    %v268 = vrot.slane %v256, 1
    %v269 = vrot.slane %v257, 1
    %v272 = vrot.slane %v256, 2
    %v273 = vrot.slane %v257, 2
    %v276 = vrot.slane %v256, 3
    %v277 = vrot.slane %v257, 3
    %v282 = vrot.slane %v264, 4
    %v283 = vrot.slane %v265, 4
    %v286 = vrot.slane %v264, 5
    %v287 = vrot.slane %v265, 5
    %v290 = vrot.slane %v264, 6
    %v291 = vrot.slane %v265, 6
    %v294 = vrot.slane %v264, 7
    %v295 = vrot.slane %v265, 7
    %v298 = vsel %vm66, %v256, %v268
    %v299 = vsel %vm66, %v257, %v269
    %vm300 = vcmask 1041408
    %v301 = vsel %vm300, %v298, %v272
    %v302 = vsel %vm300, %v299, %v273
    %vm303 = vcmask 1042432
    %v304 = vsel %vm303, %v301, %v276
    %v305 = vsel %vm303, %v302, %v277
    %v306 = vsel %vm108, %v304, %v282
    %v307 = vsel %vm108, %v305, %v283
    %vm308 = vcmask 1044480
    %v309 = vsel %vm308, %v306, %v286
    %v310 = vsel %vm308, %v307, %v287
    %v311 = vsel %vm181, %v309, %v290
    %v312 = vsel %vm181, %v310, %v291
    %v313 = vsel %vm86, %v311, %v294
    %v314 = vsel %vm86, %v312, %v295
    %v317 = vrot.slane %v313, 7
    %v318 = vrot.slane %v314, 7
    %v321 = vsel %vm66, 0.0, %v317
    %v322 = vsel %vm66, 0.0, %v318
    %v323 = vsel %vm66, %v317, 0.0
    %v324 = vsel %vm66, %v318, 0.0
    %v325 = vld [vmem:[#allocation2] sm:$0xff]
    %v326 = vld [vmem:[#allocation2 + $0x8] sm:$0xff]
    %v331 = vrot.slane %v321, 1
    %v332 = vrot.slane %v323, 1
    %v333 = vsel %vm86, %v331, %v332
    %v334 = vrot.slane %v322, 1
    %v335 = vrot.slane %v324, 1
    %v336 = vsel %vm86, %v334, %v335
    %s337 = scalar_lea.vmem [#allocation2], 16
    %v338 = vld [vmem:[%s337] sm:$0xff]
    %v339 = vld [vmem:[%s337 + $0x8] sm:$0xff]
    %vm340 = vcmask 130048
    %v341 = vsel %vm340, %v333, 0
    %v343 = vsel %vm340, %v336, 0
    %345 = vmatpush.msra.mxu0 0.0
    %346 = vmatpush.msra.mxu0 0.0
    %347 = vmatpush.msra.mxu0 0.0
    %348 = vmatpush.msra.mxu0 0.0
    %349 = vmatpush.msra.mxu0 0.0
    %350 = vmatpush.msra.mxu0 0.0
    %351 = vmatpush.msra.mxu0 0.0
    %352 = vmatpush.msra.mxu0 0.0
    %353 = vmatpush.msra.mxu0 0.0
    %354 = vmatpush.msra.mxu0 0.0
    %355 = vmatpush.msra.mxu0 0.0
    %356 = vmatpush.msra.mxu0 0.0
    %357 = vmatpush.msra.mxu0 0.0
    %358 = vmatpush.msra.mxu0 0.0
    %359 = vmatpush.msra.mxu0 %v339
    %360 = vmatpush.msra.mxu0 %v338
    %361 = vmatmul.f32.gmra.mxu0 %v341
    %v362 = vpop.f32.mrf.mxu0
    %v363 = vadd.f32 0.0, %v362
    %364 = vmatmul.f32.gmra.mxu0 %v343
    %v365 = vpop.f32.mrf.mxu0
    %v366 = vadd.f32 0.0, %v365
    %367 = vdwg.mxu0
    %v368 = vsel %vm340, %v321, 0
    %v370 = vsel %vm340, %v322, 0
    %372 = vmatpush.msra.mxu0 0.0
    %373 = vmatpush.msra.mxu0 0.0
    %374 = vmatpush.msra.mxu0 0.0
    %375 = vmatpush.msra.mxu0 0.0
    %376 = vmatpush.msra.mxu0 0.0
    %377 = vmatpush.msra.mxu0 0.0
    %378 = vmatpush.msra.mxu0 0.0
    %379 = vmatpush.msra.mxu0 0.0
    %380 = vmatpush.msra.mxu0 0.0
    %381 = vmatpush.msra.mxu0 0.0
    %382 = vmatpush.msra.mxu0 0.0
    %383 = vmatpush.msra.mxu0 0.0
    %384 = vmatpush.msra.mxu0 0.0
    %385 = vmatpush.msra.mxu0 0.0
    %386 = vmatpush.msra.mxu0 %v326
    %387 = vmatpush.msra.mxu0 %v325
    %388 = vmatmul.f32.gmra.mxu0 %v368
    %v389 = vpop.f32.mrf.mxu0
    %v390 = vadd.f32 %v363, %v389
    %391 = vmatmul.f32.gmra.mxu0 %v370
    %v392 = vpop.f32.mrf.mxu0
    %v393 = vadd.f32 %v366, %v392
    %394 = vdwg.mxu0
    %v395 = vrot.slane %v321, 2
    %v396 = vrot.slane %v323, 2
    %v397 = vsel %vm181, %v395, %v396
    %v398 = vrot.slane %v322, 2
    %v399 = vrot.slane %v324, 2
    %v400 = vsel %vm181, %v398, %v399
    %s401 = scalar_lea.vmem [#allocation2], 32
    %v402 = vld [vmem:[%s401] sm:$0xff]
    %v403 = vld [vmem:[%s401 + $0x8] sm:$0xff]
    %v404 = vsel %vm340, %v397, 0
    %v406 = vsel %vm340, %v400, 0
    %408 = vmatpush.msra.mxu0 0.0
    %409 = vmatpush.msra.mxu0 0.0
    %410 = vmatpush.msra.mxu0 0.0
    %411 = vmatpush.msra.mxu0 0.0
    %412 = vmatpush.msra.mxu0 0.0
    %413 = vmatpush.msra.mxu0 0.0
    %414 = vmatpush.msra.mxu0 0.0
    %415 = vmatpush.msra.mxu0 0.0
    %416 = vmatpush.msra.mxu0 0.0
    %417 = vmatpush.msra.mxu0 0.0
    %418 = vmatpush.msra.mxu0 0.0
    %419 = vmatpush.msra.mxu0 0.0
    %420 = vmatpush.msra.mxu0 0.0
    %421 = vmatpush.msra.mxu0 0.0
    %422 = vmatpush.msra.mxu0 %v403
    %423 = vmatpush.msra.mxu0 %v402
    %424 = vmatmul.f32.gmra.mxu0 %v404
    %v425 = vpop.f32.mrf.mxu0
    %v426 = vadd.f32 0.0, %v425
    %427 = vmatmul.f32.gmra.mxu0 %v406
    %v428 = vpop.f32.mrf.mxu0
    %v429 = vadd.f32 0.0, %v428
    %430 = vdwg.mxu0
    %v431 = vadd.f32 %v390, %v426
    %v432 = vadd.f32 %v393, %v429
    %v433 = vld [vmem:[%s4] sm:$0x1]
    %v435 = vperm.slane %v433, 0
    %v437 = vadd.f32 %v431, %v435
    %v438 = vadd.f32 %v432, %v435
    %v439 = vmax.f32 %v437, 0.0
    %v440 = vmax.f32 %v438, 0.0
    %v443 = vrot.slane %v439, 1
    %v444 = vrot.slane %v440, 1
    %v447 = vmax.f32 %v439, %v443
    %v448 = vmax.f32 %v440, %v444
    %v451 = vrot.slane %v447, 1
    %v452 = vrot.slane %v448, 1
    %v455 = vrot.slane %v447, 2
    %v456 = vrot.slane %v448, 2
    %v459 = vrot.slane %v447, 3
    %v460 = vrot.slane %v448, 3
    %v463 = vsel %vm66, %v447, %v451
    %v464 = vsel %vm66, %v448, %v452
    %v465 = vsel %vm300, %v463, %v455
    %v466 = vsel %vm300, %v464, %v456
    %v467 = vsel %vm303, %v465, %v459
    %v468 = vsel %vm303, %v466, %v460
    %v469 = vld [vmem:[%s5] sm:$0xff]
    %v470 = vld [vmem:[%s5 + $0x8] sm:$0xff]
    %v471 = vld [vmem:[%s7] sm:$0x1]
    %v473 = vperm.slane %v471, 0
    %477 = vst [vmem:[#allocation1] ss:$2 sm:$0xff] %v467
    %s478 = scalar_lea.vmem [#allocation1], 1
    %479 = vst [vmem:[%s478] ss:$2 sm:$0xff] %v468
    %v480 = vld.sshfl [vmem:[#allocation1] sm:$0xff pattern:$0x75316420]
    %v481 = vsel %vm340, %v480, 0
    %483 = vmatpush.msra.mxu0 0.0
    %484 = vmatpush.msra.mxu0 0.0
    %485 = vmatpush.msra.mxu0 0.0
    %486 = vmatpush.msra.mxu0 0.0
    %487 = vmatpush.msra.mxu0 0.0
    %488 = vmatpush.msra.mxu0 0.0
    %489 = vmatpush.msra.mxu0 0.0
    %490 = vmatpush.msra.mxu0 0.0
    %491 = vmatpush.msra.mxu0 0.0
    %492 = vmatpush.msra.mxu0 0.0
    %493 = vmatpush.msra.mxu0 0.0
    %494 = vmatpush.msra.mxu0 0.0
    %495 = vmatpush.msra.mxu0 0.0
    %496 = vmatpush.msra.mxu0 0.0
    %497 = vmatpush.msra.mxu0 %v470
    %498 = vmatpush.msra.mxu0 %v469
    %499 = vmatmul.f32.gmra.mxu0 %v481
    %v500 = vpop.f32.mrf.mxu0
    %v501 = vadd.f32 %v473, %v500
    %502 = vdwg.mxu0
    %v504 = vrot.slane %v501, 4
    %v506 = vld [vmem:[%s6] sm:$0xff]
    %vm507 = vcmask 64512
    %v509 = vsel %vm507, 0.0, 0
    %511 = vmatpush.msra.mxu0 0.0
    %512 = vmatpush.msra.mxu0 0.0
    %513 = vmatpush.msra.mxu0 0.0
    %514 = vmatpush.msra.mxu0 0.0
    %515 = vmatpush.msra.mxu0 0.0
    %516 = vmatpush.msra.mxu0 0.0
    %517 = vmatpush.msra.mxu0 0.0
    %518 = vmatpush.msra.mxu0 0.0
    %519 = vmatpush.msra.mxu0 0.0
    %520 = vmatpush.msra.mxu0 0.0
    %521 = vmatpush.msra.mxu0 0.0
    %522 = vmatpush.msra.mxu0 0.0
    %523 = vmatpush.msra.mxu0 0.0
    %524 = vmatpush.msra.mxu0 0.0
    %525 = vmatpush.msra.mxu0 0.0
    %526 = vmatpush.msra.mxu0 %v506
    %527 = vmatmul.f32.gmra.mxu0 %v509
    %v528 = vpop.f32.mrf.mxu0
    %v529 = vadd.f32 0.0, %v528
    %530 = vdwg.mxu0
    %v532 = vrot.slane %v529, 1
    %v535 = vadd.f32 %v501, %v529
    %v536 = vadd.f32 %v504, %v532
    %v537 = vxor.u32 %v535, 2147483648
    %v538 = vxor.u32 %v536, 2147483648
    %v539 = vmul.f32 %v537, 1.442695
    %v540 = vpow.pop %v539
    %v541 = vmul.f32 %v538, 1.442695
    %v542 = vpow.pop %v541
    %v543 = vadd.f32 %v540, 1.0
    %v544 = vadd.f32 %v542, 1.0
    %v545 = vrcp.pop %v543
    %v546 = vmul.f32 %v543, %v545
    %v547 = vsub.f32 1.0, %v546
    %v548 = vmul.f32 %v545, %v547
    %v549 = vadd.f32 %v545, %v548
    %vm550 = vweird.f32 %v543
    %vm551 = vweird.f32 %v545
    %vm552 = vmor %vm550, %vm551
    %v553 = vsel %vm552, %v545, %v549
    %v554 = vand.u32 2147483647, %v543
    %vm555 = vcmp.eq.f32.partialorder %v554, 8.507059e+37
    %v556 = vand.u32 %v543, 2147483648
    %v557 = vor.u32 1.1754944e-38, %v556
    %v558 = vsel %vm555, %v557, %v553
    %v559 = vmul.f32 1.0, %v558
    %v560 = vrcp.pop %v544
    %v561 = vmul.f32 %v544, %v560
    %v562 = vsub.f32 1.0, %v561
    %v563 = vmul.f32 %v560, %v562
    %v564 = vadd.f32 %v560, %v563
    %vm565 = vweird.f32 %v544
    %vm566 = vweird.f32 %v560
    %vm567 = vmor %vm565, %vm566
    %v568 = vsel %vm567, %v560, %v564
    %v569 = vand.u32 2147483647, %v544
    %vm570 = vcmp.eq.f32.partialorder %v569, 8.507059e+37
    %v571 = vand.u32 %v544, 2147483648
    %v572 = vor.u32 1.1754944e-38, %v571
    %v573 = vsel %vm570, %v572, %v568
    %v574 = vmul.f32 1.0, %v573
    %v575 = vtanh.pop %v535
    %v576 = vtanh.pop %v536
    %v577 = vmul.f32 %v559, 0.0
    %v578 = vmul.f32 %v574, 0.0
    %581 = vrot.lane.b32.xlu0 %v575, 112
    %v582 = vpop.permute.xlu0 %581
    %583 = vrot.lane.b32.xlu0 %v576, 112
    %v584 = vpop.permute.xlu0 %583
    %v587 = vmul.f32 %v559, %v582
    %v588 = vmul.f32 %v574, %v584
    %591 = vrot.lane.b32.xlu0 %v587, 8
    %v592 = vpop.permute.xlu0 %591
    %593 = vrot.lane.b32.xlu0 %v588, 8
    %v594 = vpop.permute.xlu0 %593
    %v597 = vadd.f32 %v577, %v592
    %v598 = vadd.f32 %v578, %v594
    %v599 = vtanh.pop %v597
    %v600 = vtanh.pop %v598
    %603 = vrot.lane.b32.xlu0 %v599, 16
    %v604 = vpop.permute.xlu0 %603
    %605 = vrot.lane.b32.xlu0 %v600, 16
    %v606 = vpop.permute.xlu0 %605
    %v609 = vmul.f32 %v559, %v604
    %v610 = vmul.f32 %v574, %v606
    %v613 = vperm.slane %v609, 0
    %v614 = vperm.slane %v610, 0
    %vm615 = vcmask 1041409
    %v616 = vsel %vm615, %v614, %v613
    %617 = vrot.lane.b32.xlu0 %v616, 104
    %v618 = vpop.permute.xlu0 %617
    %v619 = vsel %vm507, %v618, 0
    %621 = vmatpush.msra.mxu0 0.0
    %622 = vmatpush.msra.mxu0 0.0
    %623 = vmatpush.msra.mxu0 0.0
    %624 = vmatpush.msra.mxu0 0.0
    %625 = vmatpush.msra.mxu0 0.0
    %626 = vmatpush.msra.mxu0 0.0
    %627 = vmatpush.msra.mxu0 0.0
    %628 = vmatpush.msra.mxu0 0.0
    %629 = vmatpush.msra.mxu0 0.0
    %630 = vmatpush.msra.mxu0 0.0
    %631 = vmatpush.msra.mxu0 0.0
    %632 = vmatpush.msra.mxu0 0.0
    %633 = vmatpush.msra.mxu0 0.0
    %634 = vmatpush.msra.mxu0 0.0
    %635 = vmatpush.msra.mxu0 0.0
    %636 = vmatpush.msra.mxu0 %v506
    %637 = vmatmul.f32.gmra.mxu0 %v619
    %v638 = vpop.f32.mrf.mxu0
    %v639 = vadd.f32 0.0, %v638
    %640 = vdwg.mxu0
    %v642 = vrot.slane %v639, 7
    %v645 = vadd.f32 %v501, %v642
    %v646 = vadd.f32 %v504, %v639
    %v647 = vxor.u32 %v645, 2147483648
    %v648 = vxor.u32 %v646, 2147483648
    %v649 = vmul.f32 %v647, 1.442695
    %v650 = vpow.pop %v649
    %v651 = vmul.f32 %v648, 1.442695
    %v652 = vpow.pop %v651
    %v653 = vadd.f32 %v650, 1.0
    %v654 = vadd.f32 %v652, 1.0
    %v655 = vrcp.pop %v653
    %v656 = vmul.f32 %v653, %v655
    %v657 = vsub.f32 1.0, %v656
    %v658 = vmul.f32 %v655, %v657
    %v659 = vadd.f32 %v655, %v658
    %vm660 = vweird.f32 %v653
    %vm661 = vweird.f32 %v655
    %vm662 = vmor %vm660, %vm661
    %v663 = vsel %vm662, %v655, %v659
    %v664 = vand.u32 2147483647, %v653
    %vm665 = vcmp.eq.f32.partialorder %v664, 8.507059e+37
    %v666 = vand.u32 %v653, 2147483648
    %v667 = vor.u32 1.1754944e-38, %v666
    %v668 = vsel %vm665, %v667, %v663
    %v669 = vmul.f32 1.0, %v668
    %v670 = vrcp.pop %v654
    %v671 = vmul.f32 %v654, %v670
    %v672 = vsub.f32 1.0, %v671
    %v673 = vmul.f32 %v670, %v672
    %v674 = vadd.f32 %v670, %v673
    %vm675 = vweird.f32 %v654
    %vm676 = vweird.f32 %v670
    %vm677 = vmor %vm675, %vm676
    %v678 = vsel %vm677, %v670, %v674
    %v679 = vand.u32 2147483647, %v654
    %vm680 = vcmp.eq.f32.partialorder %v679, 8.507059e+37
    %v681 = vand.u32 %v654, 2147483648
    %v682 = vor.u32 1.1754944e-38, %v681
    %v683 = vsel %vm680, %v682, %v678
    %v684 = vmul.f32 1.0, %v683
    %v685 = vtanh.pop %v645
    %v686 = vtanh.pop %v646
    %v689 = vrot.slane %v597, 7
    %v690 = vrot.slane %v598, 7
    %v693 = vmul.f32 %v669, %v689
    %v694 = vmul.f32 %v684, %v690
    %697 = vrot.lane.b32.xlu0 %v685, 112
    %v698 = vpop.permute.xlu0 %697
    %699 = vrot.lane.b32.xlu0 %v686, 112
    %v700 = vpop.permute.xlu0 %699
    %v703 = vmul.f32 %v669, %v698
    %v704 = vmul.f32 %v684, %v700
    %707 = vrot.lane.b32.xlu0 %v703, 8
    %v708 = vpop.permute.xlu0 %707
    %709 = vrot.lane.b32.xlu0 %v704, 8
    %v710 = vpop.permute.xlu0 %709
    %v713 = vadd.f32 %v693, %v708
    %v714 = vadd.f32 %v694, %v710
    %v715 = vtanh.pop %v713
    %v716 = vtanh.pop %v714
    %719 = vrot.lane.b32.xlu0 %v715, 16
    %v720 = vpop.permute.xlu0 %719
    %721 = vrot.lane.b32.xlu0 %v716, 16
    %v722 = vpop.permute.xlu0 %721
    %v725 = vmul.f32 %v669, %v720
    %v726 = vmul.f32 %v684, %v722
    %v729 = vperm.slane %v725, 1
    %v730 = vperm.slane %v726, 1
    %v731 = vsel %vm615, %v730, %v729
    %732 = vrot.lane.b32.xlu0 %v731, 104
    %v733 = vpop.permute.xlu0 %732
    %v734 = vsel %vm507, %v733, 0
    %736 = vmatpush.msra.mxu0 0.0
    %737 = vmatpush.msra.mxu0 0.0
    %738 = vmatpush.msra.mxu0 0.0
    %739 = vmatpush.msra.mxu0 0.0
    %740 = vmatpush.msra.mxu0 0.0
    %741 = vmatpush.msra.mxu0 0.0
    %742 = vmatpush.msra.mxu0 0.0
    %743 = vmatpush.msra.mxu0 0.0
    %744 = vmatpush.msra.mxu0 0.0
    %745 = vmatpush.msra.mxu0 0.0
    %746 = vmatpush.msra.mxu0 0.0
    %747 = vmatpush.msra.mxu0 0.0
    %748 = vmatpush.msra.mxu0 0.0
    %749 = vmatpush.msra.mxu0 0.0
    %750 = vmatpush.msra.mxu0 0.0
    %751 = vmatpush.msra.mxu0 %v506
    %752 = vmatmul.f32.gmra.mxu0 %v734
    %v753 = vpop.f32.mrf.mxu0
    %v754 = vadd.f32 0.0, %v753
    %755 = vdwg.mxu0
    %v757 = vrot.slane %v754, 6
    %v758 = vrot.slane %v754, 7
    %v761 = vadd.f32 %v501, %v757
    %v762 = vadd.f32 %v504, %v758
    %v763 = vxor.u32 %v761, 2147483648
    %v764 = vxor.u32 %v762, 2147483648
    %v765 = vmul.f32 %v763, 1.442695
    %v766 = vpow.pop %v765
    %v767 = vmul.f32 %v764, 1.442695
    %v768 = vpow.pop %v767
    %v769 = vadd.f32 %v766, 1.0
    %v770 = vadd.f32 %v768, 1.0
    %v771 = vrcp.pop %v769
    %v772 = vmul.f32 %v769, %v771
    %v773 = vsub.f32 1.0, %v772
    %v774 = vmul.f32 %v771, %v773
    %v775 = vadd.f32 %v771, %v774
    %vm776 = vweird.f32 %v769
    %vm777 = vweird.f32 %v771
    %vm778 = vmor %vm776, %vm777
    %v779 = vsel %vm778, %v771, %v775
    %v780 = vand.u32 2147483647, %v769
    %vm781 = vcmp.eq.f32.partialorder %v780, 8.507059e+37
    %v782 = vand.u32 %v769, 2147483648
    %v783 = vor.u32 1.1754944e-38, %v782
    %v784 = vsel %vm781, %v783, %v779
    %v785 = vmul.f32 1.0, %v784
    %v786 = vrcp.pop %v770
    %v787 = vmul.f32 %v770, %v786
    %v788 = vsub.f32 1.0, %v787
    %v789 = vmul.f32 %v786, %v788
    %v790 = vadd.f32 %v786, %v789
    %vm791 = vweird.f32 %v770
    %vm792 = vweird.f32 %v786
    %vm793 = vmor %vm791, %vm792
    %v794 = vsel %vm793, %v786, %v790
    %v795 = vand.u32 2147483647, %v770
    %vm796 = vcmp.eq.f32.partialorder %v795, 8.507059e+37
    %v797 = vand.u32 %v770, 2147483648
    %v798 = vor.u32 1.1754944e-38, %v797
    %v799 = vsel %vm796, %v798, %v794
    %v800 = vmul.f32 1.0, %v799
    %v801 = vtanh.pop %v761
    %v802 = vtanh.pop %v762
    %v805 = vrot.slane %v713, 7
    %v806 = vrot.slane %v714, 7
    %v809 = vmul.f32 %v785, %v805
    %v810 = vmul.f32 %v800, %v806
    %813 = vrot.lane.b32.xlu0 %v801, 112
    %v814 = vpop.permute.xlu0 %813
    %815 = vrot.lane.b32.xlu0 %v802, 112
    %v816 = vpop.permute.xlu0 %815
    %v819 = vmul.f32 %v785, %v814
    %v820 = vmul.f32 %v800, %v816
    %823 = vrot.lane.b32.xlu0 %v819, 8
    %v824 = vpop.permute.xlu0 %823
    %825 = vrot.lane.b32.xlu0 %v820, 8
    %v826 = vpop.permute.xlu0 %825
    %v829 = vadd.f32 %v809, %v824
    %v830 = vadd.f32 %v810, %v826
    %v831 = vtanh.pop %v829
    %v832 = vtanh.pop %v830
    %835 = vrot.lane.b32.xlu0 %v831, 16
    %v836 = vpop.permute.xlu0 %835
    %837 = vrot.lane.b32.xlu0 %v832, 16
    %v838 = vpop.permute.xlu0 %837
    %v841 = vmul.f32 %v785, %v836
    %v842 = vmul.f32 %v800, %v838
    %v845 = vperm.slane %v841, 2
    %v846 = vperm.slane %v842, 2
    %v847 = vsel %vm615, %v846, %v845
    %848 = vrot.lane.b32.xlu0 %v847, 104
    %v849 = vpop.permute.xlu0 %848
    %v850 = vsel %vm507, %v849, 0
    %852 = vmatpush.msra.mxu0 0.0
    %853 = vmatpush.msra.mxu0 0.0
    %854 = vmatpush.msra.mxu0 0.0
    %855 = vmatpush.msra.mxu0 0.0
    %856 = vmatpush.msra.mxu0 0.0
    %857 = vmatpush.msra.mxu0 0.0
    %858 = vmatpush.msra.mxu0 0.0
    %859 = vmatpush.msra.mxu0 0.0
    %860 = vmatpush.msra.mxu0 0.0
    %861 = vmatpush.msra.mxu0 0.0
    %862 = vmatpush.msra.mxu0 0.0
    %863 = vmatpush.msra.mxu0 0.0
    %864 = vmatpush.msra.mxu0 0.0
    %865 = vmatpush.msra.mxu0 0.0
    %866 = vmatpush.msra.mxu0 0.0
    %867 = vmatpush.msra.mxu0 %v506
    %868 = vmatmul.f32.gmra.mxu0 %v850
    %v869 = vpop.f32.mrf.mxu0
    %v870 = vadd.f32 0.0, %v869
    %871 = vdwg.mxu0
    %v873 = vrot.slane %v870, 5
    %v874 = vrot.slane %v870, 6
    %v877 = vadd.f32 %v501, %v873
    %v878 = vadd.f32 %v504, %v874
    %v879 = vxor.u32 %v877, 2147483648
    %v880 = vxor.u32 %v878, 2147483648
    %v881 = vmul.f32 %v879, 1.442695
    %v882 = vpow.pop %v881
    %v883 = vmul.f32 %v880, 1.442695
    %v884 = vpow.pop %v883
    %v885 = vadd.f32 %v882, 1.0
    %v886 = vadd.f32 %v884, 1.0
    %v887 = vrcp.pop %v885
    %v888 = vmul.f32 %v885, %v887
    %v889 = vsub.f32 1.0, %v888
    %v890 = vmul.f32 %v887, %v889
    %v891 = vadd.f32 %v887, %v890
    %vm892 = vweird.f32 %v885
    %vm893 = vweird.f32 %v887
    %vm894 = vmor %vm892, %vm893
    %v895 = vsel %vm894, %v887, %v891
    %v896 = vand.u32 2147483647, %v885
    %vm897 = vcmp.eq.f32.partialorder %v896, 8.507059e+37
    %v898 = vand.u32 %v885, 2147483648
    %v899 = vor.u32 1.1754944e-38, %v898
    %v900 = vsel %vm897, %v899, %v895
    %v901 = vmul.f32 1.0, %v900
    %v902 = vrcp.pop %v886
    %v903 = vmul.f32 %v886, %v902
    %v904 = vsub.f32 1.0, %v903
    %v905 = vmul.f32 %v902, %v904
    %v906 = vadd.f32 %v902, %v905
    %vm907 = vweird.f32 %v886
    %vm908 = vweird.f32 %v902
    %vm909 = vmor %vm907, %vm908
    %v910 = vsel %vm909, %v902, %v906
    %v911 = vand.u32 2147483647, %v886
    %vm912 = vcmp.eq.f32.partialorder %v911, 8.507059e+37
    %v913 = vand.u32 %v886, 2147483648
    %v914 = vor.u32 1.1754944e-38, %v913
    %v915 = vsel %vm912, %v914, %v910
    %v916 = vmul.f32 1.0, %v915
    %v917 = vtanh.pop %v877
    %v918 = vtanh.pop %v878
    %v921 = vrot.slane %v829, 7
    %v922 = vrot.slane %v830, 7
    %v925 = vmul.f32 %v901, %v921
    %v926 = vmul.f32 %v916, %v922
    %929 = vrot.lane.b32.xlu0 %v917, 112
    %v930 = vpop.permute.xlu0 %929
    %931 = vrot.lane.b32.xlu0 %v918, 112
    %v932 = vpop.permute.xlu0 %931
    %v935 = vmul.f32 %v901, %v930
    %v936 = vmul.f32 %v916, %v932
    %939 = vrot.lane.b32.xlu0 %v935, 8
    %v940 = vpop.permute.xlu0 %939
    %941 = vrot.lane.b32.xlu0 %v936, 8
    %v942 = vpop.permute.xlu0 %941
    %v945 = vadd.f32 %v925, %v940
    %v946 = vadd.f32 %v926, %v942
    %v947 = vtanh.pop %v945
    %v948 = vtanh.pop %v946
    %951 = vrot.lane.b32.xlu0 %v947, 16
    %v952 = vpop.permute.xlu0 %951
    %953 = vrot.lane.b32.xlu0 %v948, 16
    %v954 = vpop.permute.xlu0 %953
    %v957 = vmul.f32 %v901, %v952
    %v958 = vmul.f32 %v916, %v954
    %v959 = vld [vmem:[%s8] sm:$0xff]
    %v960 = vld [vmem:[%s9] sm:$0x1]
    %v962 = vperm.slane %v960, 0
    %v966 = vperm.slane %v957, 3
    %v967 = vperm.slane %v958, 3
    %v968 = vsel %vm615, %v967, %v966
    %969 = vrot.lane.b32.xlu0 %v968, 104
    %v970 = vpop.permute.xlu0 %969
    %v971 = vsel %vm507, %v970, 0
    %973 = vmatpush.msra.mxu0 0.0
    %974 = vmatpush.msra.mxu0 0.0
    %975 = vmatpush.msra.mxu0 0.0
    %976 = vmatpush.msra.mxu0 0.0
    %977 = vmatpush.msra.mxu0 0.0
    %978 = vmatpush.msra.mxu0 0.0
    %979 = vmatpush.msra.mxu0 0.0
    %980 = vmatpush.msra.mxu0 0.0
    %981 = vmatpush.msra.mxu0 0.0
    %982 = vmatpush.msra.mxu0 0.0
    %983 = vmatpush.msra.mxu0 0.0
    %984 = vmatpush.msra.mxu0 0.0
    %985 = vmatpush.msra.mxu0 0.0
    %986 = vmatpush.msra.mxu0 0.0
    %987 = vmatpush.msra.mxu0 0.0
    %988 = vmatpush.msra.mxu0 %v959
    %989 = vmatmul.f32.gmra.mxu0 %v971
    %v990 = vpop.f32.mrf.mxu0
    %v991 = vadd.f32 %v962, %v990
    %992 = vdwg.mxu0
    %v993 = vld [vmem:[%s10] sm:$0xf]
    %v994 = vld [vmem:[%s11] sm:$0x1]
    %v996 = vperm.slane %v994, 0
    %v999 = vsel %vm99, %v991, 0
    %v1002 = vsel %vm108, %v993, 0
    %1004 = vmatpush.msra.mxu0 0.0
    %1005 = vmatpush.msra.mxu0 0.0
    %1006 = vmatpush.msra.mxu0 0.0
    %1007 = vmatpush.msra.mxu0 0.0
    %1008 = vmatpush.msra.mxu0 0.0
    %1009 = vmatpush.msra.mxu0 0.0
    %1010 = vmatpush.msra.mxu0 0.0
    %1011 = vmatpush.msra.mxu0 0.0
    %1012 = vmatpush.msra.mxu0 0.0
    %1013 = vmatpush.msra.mxu0 0.0
    %1014 = vmatpush.msra.mxu0 0.0
    %1015 = vmatpush.msra.mxu0 0.0
    %1016 = vmatpush.msra.mxu0 0.0
    %1017 = vmatpush.msra.mxu0 0.0
    %1018 = vmatpush.msra.mxu0 0.0
    %1019 = vmatpush.msra.mxu0 %v1002
    %1020 = vmatmul.f32.gmra.mxu0 %v999
    %v1021 = vpop.f32.mrf.mxu0
    %v1022 = vadd.f32 %v996, %v1021
    %1023 = vdwg.mxu0
    %vm1024 = vcmask 91136
    %1025 = vst.msk [vmem:[#allocation5] sm:$0x3] %vm1024, %v1022
    // Predicated region
    $region54: #{tpu_custom_call.1} parent=1 // pred_check
      _
    $region55: #{tpu_custom_call.1} parent=1 // pred_check_branch
      %1027 = sbr.rel (0) target = $region57
    $region56: #{tpu_custom_call.1} parent=1 // pred_region
      %1029 = vsyncadd [#allocation4], 0
      %s1031 = sshll.u32 [#allocation5], 4
      %s1032 = int_to_ptr.vmem [resolvable:$true] %s1031
      %s1033 = sshll.u32 %s12, 4
      %s1034 = int_to_ptr.hbm [resolvable:$true] %s1033
      %1036 = dma.vmem_to_hbm [thread:$0]  %s1032, 32, %s1034, [#allocation4]
    $region57: #{tpu_custom_call.1} parent=1 // pred_fallthru
      _
    // Predicated region
    $region58: #{tpu_custom_call.1} parent=1 // pred_check
      _
    $region59: #{tpu_custom_call.1} parent=1 // pred_check_branch
      %1038 = sbr.rel (0) target = $region61
    $region60: #{tpu_custom_call.1} parent=1 // pred_region
      %1040 = dma.done [#allocation4], 32
    $region61: #{tpu_custom_call.1} parent=1 // pred_fallthru
      _
    %1041 = vsyncpa [#allocation3], 1
    %1042 = vsyncpa [#allocation4], 1

</llo_original>
